<compile_context>
chip_gen: v7x
topology: tpu7x:2x2x1
jax: 0.10.0
libtpu: 0.0.40
codegen_flags: <defaults>
</compile_context>

<pallas_src>
import jax
import jax.numpy as jnp
from jax.experimental import pallas as pl
from jax.experimental.pallas import tpu as pltpu  # noqa: F401  (kept for TPU-specific extensions)

# ------------------------- small hyper-parameters -----------------------------
N = 8          # batch (n)
Q = 8          # n_queries
D_IN = 32      # d_queries_in
D_OUT = 32     # d_queries_out (== D_IN so n_layers > 1 composes, as the module implies)
N_LAYERS = 2
GROUP_LANES = 128   # target dense-block width (one MXU tile / one vreg lane span)


# ------------------------------- the kernel -----------------------------------
def queries_embedding_kernel(x_ref, *rest):
    """x_ref: (N, Q*D_IN) f32; per layer: w_ref (G, K, O) bf16 block-diag groups, b_ref (1, Q*O) f32."""
    *wb_refs, out_ref = rest
    n_layers = len(wb_refs) // 2

    x = x_ref[...]                                          # (N, Q*D_IN) f32
    for l in range(n_layers):
        w_ref = wb_refs[2 * l]                              # (G, K, O) bf16
        b = wb_refs[2 * l + 1][...]                         # (1, Q*O)   f32
        g, k, o = w_ref.shape
        parts = []
        for gi in range(g):                                 # static unrolled loop (G = 2)
            xg = x[:, gi * k:(gi + 1) * k].astype(w_ref.dtype)   # 128-lane aligned slice
            parts.append(jnp.dot(xg, w_ref[gi],                  # (N,128)@(128,128) on MXU
                                 preferred_element_type=jnp.float32))
        y = parts[0] if g == 1 else jnp.concatenate(parts, axis=1)  # lane-dense (N, Q*O)
        x = jnp.maximum(y + b, 0.0)                         # bias + ReLU in f32
    out_ref[...] = x.astype(out_ref.dtype)                  # lane-dense store


# ------------------------- one-time weight re-layout ---------------------------
def prepare_params(weights, biases, group_lanes=GROUP_LANES, weight_dtype=jnp.bfloat16):
    """Pack per-query weights (Q, I, O) into grouped block-diagonal slabs (G, qg*I, qg*O).

    Call ONCE at init; the result is reused by every forward call (no per-call packing,
    no per-call HBM round-trip of re-built weights).
    """
    packed = []
    for w, b in zip(weights, biases):
        q, i, o = w.shape
        qg = max(1, group_lanes // max(i, o))               # queries per 128-lane group
        while q % qg:                                       # keep groups even
            qg -= 1
        g = q // qg
        eye = jnp.eye(qg, dtype=w.dtype)
        wg = w.reshape(g, qg, i, o)
        # wbd[gr, q*i + ii, p*o + oo] = w[gr*qg + q, ii, oo] * (q == p)
        wbd = jnp.einsum('gqio,qp->gqipo', wg, eye).reshape(g, qg * i, qg * o)
        packed.append((wbd.astype(weight_dtype), b.reshape(1, q * o).astype(jnp.float32)))
    return packed


# ------------------------------- forward wrapper --------------------------------
def _full_spec(shape):
    zeros = (0,) * len(shape)
    return pl.BlockSpec(shape, lambda *_: zeros)            # gridless: whole array in VMEM


def queries_embedding(x, packed_params):
    """x: (N, Q, D_IN) f32; packed_params: list of (wbd (G,K,O) bf16, bias (1,Q*O) f32)."""
    n, q, d_in = x.shape
    d_out = packed_params[-1][1].shape[-1] // q

    x_flat = x.reshape(n, q * d_in)
    flat_params = []
    in_specs = [_full_spec((n, q * d_in))]
    for wbd, bf in packed_params:
        flat_params += [wbd, bf]
        in_specs += [_full_spec(wbd.shape), _full_spec(bf.shape)]

    out_flat = pl.pallas_call(
        queries_embedding_kernel,
        out_shape=jax.ShapeDtypeStruct((n, q * d_out), jnp.float32),
        in_specs=in_specs,
        out_specs=_full_spec((n, q * d_out)),
    )(x_flat, *flat_params)
    return out_flat.reshape(n, q, d_out)


# --------------------------- pure-JAX reference ---------------------------------
def reference(x, weights, biases):
    for w, b in zip(weights, biases):
        x = jnp.einsum('nqi,qio->nqo', x, w) + b
        x = jnp.maximum(x, 0.0)
    return x


# ----------------------------------- main ---------------------------------------
if __name__ == "__main__":
    key = jax.random.PRNGKey(0)
    kx, kp = jax.random.split(key)

    x = jax.random.normal(kx, (N, Q, D_IN), jnp.float32)

    # parameter init mirrors the module: normal(mean=0, std=0.01)
    pkeys = jax.random.split(kp, 2 * N_LAYERS)
    weights, biases = [], []
    for l in range(N_LAYERS):
        d_in_l = D_IN if l == 0 else D_OUT
        weights.append(0.01 * jax.random.normal(pkeys[2 * l], (Q, d_in_l, D_OUT), jnp.float32))
        biases.append(0.01 * jax.random.normal(pkeys[2 * l + 1], (Q, D_OUT), jnp.float32))

    # One-time packing (hoisted out of the forward path, equivalent to doing it at module init).
    packed = jax.block_until_ready(prepare_params(weights, biases))

    out = queries_embedding(x, packed)
    out = jax.block_until_ready(out)

    ref = reference(x, weights, biases)
    assert out.shape == (N, Q, D_OUT)
    # bf16 weights + bf16 activation cast at the dot (f32 accumulation): relaxed tolerance.
    assert jnp.allclose(out, ref, atol=5e-3, rtol=5e-2), "output mismatch vs reference"

    print("KERNEL_OK")
</pallas_src>

<mosaic_0001>
module attributes {stable_mosaic.version = 11 : i64} {
  func.func @queries_embedding_kernel(%arg0: memref<8x256xf32, #tpu.memory_space<vmem>>, %arg1: memref<2x128x128xbf16, #tpu.memory_space<vmem>>, %arg2: memref<1x256xf32, #tpu.memory_space<vmem>>, %arg3: memref<2x128x128xbf16, #tpu.memory_space<vmem>>, %arg4: memref<1x256xf32, #tpu.memory_space<vmem>>, %arg5: memref<8x256xf32, #tpu.memory_space<vmem>>) attributes {dimension_semantics = [], scalar_prefetch = 0 : i64, scratch_operands = 0 : i64, tpu.core_type = #tpu.core_type<tc>} {
    %c0 = arith.constant 0 : index
    %c0_0 = arith.constant 0 : index
    %0 = vector.load %arg0[%c0, %c0_0] : memref<8x256xf32, #tpu.memory_space<vmem>>, vector<8x256xf32>
    %c0_1 = arith.constant 0 : index
    %c0_2 = arith.constant 0 : index
    %1 = vector.load %arg2[%c0_1, %c0_2] : memref<1x256xf32, #tpu.memory_space<vmem>>, vector<1x256xf32>
    %2 = vector.extract_strided_slice %0 {offsets = [0, 0], sizes = [8, 128], strides = [1, 1]} : vector<8x256xf32> to vector<8x128xf32>
    %3 = arith.truncf %2 : vector<8x128xf32> to vector<8x128xbf16>
    %c0_3 = arith.constant 0 : index
    %c0_4 = arith.constant 0 : index
    %c0_5 = arith.constant 0 : index
    %4 = vector.load %arg1[%c0_3, %c0_4, %c0_5] : memref<2x128x128xbf16, #tpu.memory_space<vmem>>, vector<1x128x128xbf16>
    %5 = vector.shape_cast %4 : vector<1x128x128xbf16> to vector<128x128xbf16>
    %cst = arith.constant dense<0.000000e+00> : vector<8x128xf32>
    %6 = tpu.matmul %3, %5, %cst {dimension_numbers = #tpu.dot_dimension_numbers<[1], [0], [0], [1], [0, 0, 1, 1], [], []>} : vector<8x128xbf16>, vector<128x128xbf16>, vector<8x128xf32> -> vector<8x128xf32>
    %7 = vector.extract_strided_slice %0 {offsets = [0, 128], sizes = [8, 128], strides = [1, 1]} : vector<8x256xf32> to vector<8x128xf32>
    %8 = arith.truncf %7 : vector<8x128xf32> to vector<8x128xbf16>
    %c1 = arith.constant 1 : index
    %c0_6 = arith.constant 0 : index
    %c0_7 = arith.constant 0 : index
    %9 = vector.load %arg1[%c1, %c0_6, %c0_7] : memref<2x128x128xbf16, #tpu.memory_space<vmem>>, vector<1x128x128xbf16>
    %10 = vector.shape_cast %9 : vector<1x128x128xbf16> to vector<128x128xbf16>
    %cst_8 = arith.constant dense<0.000000e+00> : vector<8x128xf32>
    %11 = tpu.matmul %8, %10, %cst_8 {dimension_numbers = #tpu.dot_dimension_numbers<[1], [0], [0], [1], [0, 0, 1, 1], [], []>} : vector<8x128xbf16>, vector<128x128xbf16>, vector<8x128xf32> -> vector<8x128xf32>
    %12 = tpu.concatenate %6, %11 in 1 : vector<8x128xf32>, vector<8x128xf32> -> vector<8x256xf32>
    %13 = vector.broadcast %1 : vector<1x256xf32> to vector<8x256xf32>
    %14 = arith.addf %12, %13 : vector<8x256xf32>
    %cst_9 = arith.constant 0.000000e+00 : f32
    %15 = vector.broadcast %cst_9 : f32 to vector<8x256xf32>
    %16 = arith.maximumf %14, %15 : vector<8x256xf32>
    %c0_10 = arith.constant 0 : index
    %c0_11 = arith.constant 0 : index
    %17 = vector.load %arg4[%c0_10, %c0_11] : memref<1x256xf32, #tpu.memory_space<vmem>>, vector<1x256xf32>
    %18 = vector.extract_strided_slice %16 {offsets = [0, 0], sizes = [8, 128], strides = [1, 1]} : vector<8x256xf32> to vector<8x128xf32>
    %19 = arith.truncf %18 : vector<8x128xf32> to vector<8x128xbf16>
    %c0_12 = arith.constant 0 : index
    %c0_13 = arith.constant 0 : index
    %c0_14 = arith.constant 0 : index
    %20 = vector.load %arg3[%c0_12, %c0_13, %c0_14] : memref<2x128x128xbf16, #tpu.memory_space<vmem>>, vector<1x128x128xbf16>
    %21 = vector.shape_cast %20 : vector<1x128x128xbf16> to vector<128x128xbf16>
    %cst_15 = arith.constant dense<0.000000e+00> : vector<8x128xf32>
    %22 = tpu.matmul %19, %21, %cst_15 {dimension_numbers = #tpu.dot_dimension_numbers<[1], [0], [0], [1], [0, 0, 1, 1], [], []>} : vector<8x128xbf16>, vector<128x128xbf16>, vector<8x128xf32> -> vector<8x128xf32>
    %23 = vector.extract_strided_slice %16 {offsets = [0, 128], sizes = [8, 128], strides = [1, 1]} : vector<8x256xf32> to vector<8x128xf32>
    %24 = arith.truncf %23 : vector<8x128xf32> to vector<8x128xbf16>
    %c1_16 = arith.constant 1 : index
    %c0_17 = arith.constant 0 : index
    %c0_18 = arith.constant 0 : index
    %25 = vector.load %arg3[%c1_16, %c0_17, %c0_18] : memref<2x128x128xbf16, #tpu.memory_space<vmem>>, vector<1x128x128xbf16>
    %26 = vector.shape_cast %25 : vector<1x128x128xbf16> to vector<128x128xbf16>
    %cst_19 = arith.constant dense<0.000000e+00> : vector<8x128xf32>
    %27 = tpu.matmul %24, %26, %cst_19 {dimension_numbers = #tpu.dot_dimension_numbers<[1], [0], [0], [1], [0, 0, 1, 1], [], []>} : vector<8x128xbf16>, vector<128x128xbf16>, vector<8x128xf32> -> vector<8x128xf32>
    %28 = tpu.concatenate %22, %27 in 1 : vector<8x128xf32>, vector<8x128xf32> -> vector<8x256xf32>
    %29 = vector.broadcast %17 : vector<1x256xf32> to vector<8x256xf32>
    %30 = arith.addf %28, %29 : vector<8x256xf32>
    %cst_20 = arith.constant 0.000000e+00 : f32
    %31 = vector.broadcast %cst_20 : f32 to vector<8x256xf32>
    %32 = arith.maximumf %30, %31 : vector<8x256xf32>
    %c0_21 = arith.constant 0 : index
    %c0_22 = arith.constant 0 : index
    %33 = vector.load %arg5[%c0_21, %c0_22] : memref<8x256xf32, #tpu.memory_space<vmem>>, vector<8x256xf32>
    tpu.vector_store %arg5[%c0_21, %c0_22], %32 {strides = array<i32>} : memref<8x256xf32, #tpu.memory_space<vmem>>, vector<8x256xf32>,
    return
  }
}

</mosaic_0001>

<llo_original>
// kernel: tpu_custom_call.1
$region0: #{tpu_custom_call.1}
  #allocation0 [shape = 'u32[]', space=smem, size = 0x4, offset = 0x4, fixed_abs, tag = 'smem constant byte address 0x4 - core index']
  #allocation1 [shape = 'u32[144,128]{1,0:T(1,128)}', space=vmem, size = 0x12000, scoped, tag = 'internal scratch']
  %s0 = inlined_call_operand.hbm [shape: f32[8,256], index: 0, kind: input, shape index: {}]
  %s1 = inlined_call_operand.hbm [shape: bf16[2,128,128], index: 1, kind: input, shape index: {}]
  %s2 = inlined_call_operand.vmem [shape: f32[1,256], index: 2, kind: input, shape index: {}]
  %s3 = inlined_call_operand.hbm [shape: bf16[2,128,128], index: 3, kind: input, shape index: {}]
  %s4 = inlined_call_operand.vmem [shape: f32[1,256], index: 4, kind: input, shape index: {}]
  %s5 = inlined_call_operand.hbm [shape: f32[8,256], index: 5, kind: output, shape index: {}]
  %s6 = sld [smem:[#allocation0]]
  $region42: #{tpu_custom_call.1} parent=0
    _
  %s8 = ssub.s32 1, %s6
  %s9 = scalar_select 0, %s8, %s6
  $region1: #{tpu_custom_call.1} parent=0
    #allocation2 [shape = 'u8[8192]{0}', space=vmem, size = 0x2000, scoped, tag = 'input window, operand 0, single buffered']
    #allocation3 [shape = 's32[1]{0}', space=sflag, size = 0x4, scoped, tag = 'scoped memory for tpu_custom_call.1']
    #allocation4 [shape = 's32[1]{0}', space=sflag, size = 0x4, scoped, tag = 'scoped memory for tpu_custom_call.1']
    #allocation5 [shape = 'u8[65536]{0}', space=vmem, size = 0x10000, scoped, tag = 'input window, operand 1, single buffered']
    #allocation6 [shape = 's32[1]{0}', space=sflag, size = 0x4, scoped, tag = 'scoped memory for tpu_custom_call.1']
    #allocation7 [shape = 'u8[65536]{0}', space=vmem, size = 0x10000, scoped, tag = 'input window, operand 3, single buffered']
    #allocation8 [shape = 'u8[8192]{0}', space=vmem, size = 0x2000, scoped, tag = 'output window, operand 0, single buffered']
    %10 = vsyncpa [#allocation3], 0
    %11 = vsyncpa [#allocation6], 0
    %12 = vsyncpa [#allocation4], 0
    // Predicated region
    $region2: #{tpu_custom_call.1} parent=1 // pred_check
      _
    $region3: #{tpu_custom_call.1} parent=1 // pred_check_branch
      %14 = sbr.rel (0) target = $region5
    $region4: #{tpu_custom_call.1} parent=1 // pred_region
      %s16 = ssub.s32 256, 256
      %17 = vsyncadd [#allocation3], %s16
      %s19 = sshll.u32 [#allocation2], 4
      %s20 = int_to_ptr.vmem [resolvable:$true] %s19
      %22 = dma.hbm_to_vmem [thread:$0]  %s0, 256, %s20, [#allocation3]
    $region5: #{tpu_custom_call.1} parent=1 // pred_fallthru
      _
    // Predicated region
    $region6: #{tpu_custom_call.1} parent=1 // pred_check
      _
    $region7: #{tpu_custom_call.1} parent=1 // pred_check_branch
      %24 = sbr.rel (0) target = $region9
    $region8: #{tpu_custom_call.1} parent=1 // pred_region
      %s26 = ssub.s32 2048, 2048
      %27 = vsyncadd [#allocation6], %s26
      %s28 = sshll.u32 [#allocation5], 4
      %s29 = int_to_ptr.vmem [resolvable:$true] %s28
      %34 = dma.hbm_to_vmem [thread:$0]  %s1, 2048, %s29, [#allocation6], 64, 64, 4
    $region9: #{tpu_custom_call.1} parent=1 // pred_fallthru
      _
    // Predicated region
    $region10: #{tpu_custom_call.1} parent=1 // pred_check
      _
    $region11: #{tpu_custom_call.1} parent=1 // pred_check_branch
      %36 = sbr.rel (0) target = $region13
    $region12: #{tpu_custom_call.1} parent=1 // pred_region
      _
    $region13: #{tpu_custom_call.1} parent=1 // pred_fallthru
      _
    // Predicated region
    $region14: #{tpu_custom_call.1} parent=1 // pred_check
      _
    $region15: #{tpu_custom_call.1} parent=1 // pred_check_branch
      %38 = sbr.rel (0) target = $region17
    $region16: #{tpu_custom_call.1} parent=1 // pred_region
      %s40 = ssub.s32 2048, 2048
      %41 = vsyncadd [#allocation6], %s40
      %s42 = sshll.u32 [#allocation7], 4
      %s43 = int_to_ptr.vmem [resolvable:$true] %s42
      %48 = dma.hbm_to_vmem [thread:$0]  %s3, 2048, %s43, [#allocation6], 64, 64, 4
    $region17: #{tpu_custom_call.1} parent=1 // pred_fallthru
      _
    // Predicated region
    $region18: #{tpu_custom_call.1} parent=1 // pred_check
      _
    $region19: #{tpu_custom_call.1} parent=1 // pred_check_branch
      %50 = sbr.rel (0) target = $region21
    $region20: #{tpu_custom_call.1} parent=1 // pred_region
      _
    $region21: #{tpu_custom_call.1} parent=1 // pred_fallthru
      _
    // Predicated region
    $region22: #{tpu_custom_call.1} parent=1 // pred_check
      _
    $region23: #{tpu_custom_call.1} parent=1 // pred_check_branch
      %52 = sbr.rel (0) target = $region25
    $region24: #{tpu_custom_call.1} parent=1 // pred_region
      %53 = dma.done [#allocation3], 256
    $region25: #{tpu_custom_call.1} parent=1 // pred_fallthru
      _
    // Predicated region
    $region26: #{tpu_custom_call.1} parent=1 // pred_check
      _
    $region27: #{tpu_custom_call.1} parent=1 // pred_check_branch
      %55 = sbr.rel (0) target = $region29
    $region28: #{tpu_custom_call.1} parent=1 // pred_region
      %56 = dma.done [#allocation6], 2048
    $region29: #{tpu_custom_call.1} parent=1 // pred_fallthru
      _
    // Predicated region
    $region30: #{tpu_custom_call.1} parent=1 // pred_check
      _
    $region31: #{tpu_custom_call.1} parent=1 // pred_check_branch
      %58 = sbr.rel (0) target = $region33
    $region32: #{tpu_custom_call.1} parent=1 // pred_region
      %59 = dma.done [#allocation6], 2048
    $region33: #{tpu_custom_call.1} parent=1 // pred_fallthru
      _
    %v61 = vld [vmem:[#allocation2] sm:$0xff]
    %v62 = vld [vmem:[#allocation2 + $0x8] sm:$0xff]
    %v63 = vld [vmem:[%s2] sm:$0x3]
    %v64 = vpack.c.bf16 %v61, %v61
    %v65 = vld [vmem:[#allocation5] sm:$0xf]
    %v66 = vld [vmem:[#allocation5 + $0x4] sm:$0xf]
    %v67 = vld [vmem:[#allocation5 + $0x8] sm:$0xf]
    %v68 = vld [vmem:[#allocation5 + $0xc] sm:$0xf]
    %v69 = vld [vmem:[#allocation5 + $0x10] sm:$0xf]
    %v70 = vld [vmem:[#allocation5 + $0x14] sm:$0xf]
    %v71 = vld [vmem:[#allocation5 + $0x18] sm:$0xf]
    %v72 = vld [vmem:[#allocation5 + $0x1c] sm:$0xf]
    %v73 = vld [vmem:[#allocation5 + $0x20] sm:$0xf]
    %v74 = vld [vmem:[#allocation5 + $0x24] sm:$0xf]
    %v75 = vld [vmem:[#allocation5 + $0x28] sm:$0xf]
    %v76 = vld [vmem:[#allocation5 + $0x2c] sm:$0xf]
    %v77 = vld [vmem:[#allocation5 + $0x30] sm:$0xf]
    %v78 = vld [vmem:[#allocation5 + $0x34] sm:$0xf]
    %v79 = vld [vmem:[#allocation5 + $0x38] sm:$0xf]
    %v80 = vld [vmem:[#allocation5 + $0x3c] sm:$0xf]
    %v97 = vunpack.c.l.b16 %v65
    %v98 = vunpack.c.l.b16 %v66
    %v99 = vunpack.c.l.b16 %v67
    %v100 = vunpack.c.l.b16 %v68
    %v101 = vunpack.c.l.b16 %v69
    %v102 = vunpack.c.l.b16 %v70
    %v103 = vunpack.c.l.b16 %v71
    %v104 = vunpack.c.l.b16 %v72
    %v105 = vunpack.c.l.b16 %v73
    %v106 = vunpack.c.l.b16 %v74
    %v107 = vunpack.c.l.b16 %v75
    %v108 = vunpack.c.l.b16 %v76
    %v109 = vunpack.c.l.b16 %v77
    %v110 = vunpack.c.l.b16 %v78
    %v111 = vunpack.c.l.b16 %v79
    %v112 = vunpack.c.l.b16 %v80
    %v113 = vpack.c.b16 %v98, %v97
    %v114 = vpack.c.b16 %v100, %v99
    %v115 = vpack.c.b16 %v102, %v101
    %v116 = vpack.c.b16 %v104, %v103
    %v117 = vpack.c.b16 %v106, %v105
    %v118 = vpack.c.b16 %v108, %v107
    %v119 = vpack.c.b16 %v110, %v109
    %v120 = vpack.c.b16 %v112, %v111
    %129 = vmatprep.subr.bf16.mxu0 0
    %130 = vmatpush1.bf16.msra.mxu0 %v113
    %131 = vmatprep.subr.bf16.mxu0 0
    %132 = vmatpush1.bf16.msra.mxu0 %v114
    %133 = vmatprep.subr.bf16.mxu0 0
    %134 = vmatpush1.bf16.msra.mxu0 %v115
    %135 = vmatprep.subr.bf16.mxu0 0
    %136 = vmatpush1.bf16.msra.mxu0 %v116
    %137 = vmatprep.subr.bf16.mxu0 0
    %138 = vmatpush1.bf16.msra.mxu0 %v117
    %139 = vmatprep.subr.bf16.mxu0 0
    %140 = vmatpush1.bf16.msra.mxu0 %v118
    %141 = vmatprep.subr.bf16.mxu0 0
    %142 = vmatpush1.bf16.msra.mxu0 %v119
    %143 = vmatprep.subr.bf16.mxu0 0
    %144 = vmatpush1.bf16.msra.mxu0 %v120
    %145 = vmatprep.subr.bf16.mxu0 0
    %146 = vmatpush1.bf16.msra.mxu0 0
    %147 = vmatprep.subr.bf16.mxu0 0
    %148 = vmatpush1.bf16.msra.mxu0 0
    %149 = vmatprep.subr.bf16.mxu0 0
    %150 = vmatpush1.bf16.msra.mxu0 0
    %151 = vmatprep.subr.bf16.mxu0 0
    %152 = vmatpush1.bf16.msra.mxu0 0
    %153 = vmatprep.subr.bf16.mxu0 0
    %154 = vmatpush1.bf16.msra.mxu0 0
    %155 = vmatprep.subr.bf16.mxu0 0
    %156 = vmatpush1.bf16.msra.mxu0 0
    %157 = vmatprep.subr.bf16.mxu0 0
    %158 = vmatpush1.bf16.msra.mxu0 0
    %159 = vmatprep.subr.bf16.mxu0 0
    %160 = vmatpush1.bf16.msra.mxu0 0
    %161 = vmatprep.mubr.bf16.mxu0 0
    %162 = vmatmul.mubr.bf16.gmra.mrb[0].mxu0 %v64
    %v163 = vpop.f32.mrb[0].mxu0
    %v164 = vadd.f32 0.0, %v163
    %v165 = vpop.f32.mrb[0].mxu0
    %v166 = vpop.f32.mrb[0].mxu0
    %v167 = vpop.f32.mrb[0].mxu0
    %168 = vdwg.mxu0
    %v169 = vpack.c.bf16 %v62, %v62
    %s170 = scalar_lea.vmem [#allocation5], 64
    %v171 = vld [vmem:[%s170] sm:$0xf]
    %v172 = vld [vmem:[%s170 + $0x4] sm:$0xf]
    %v173 = vld [vmem:[%s170 + $0x8] sm:$0xf]
    %v174 = vld [vmem:[%s170 + $0xc] sm:$0xf]
    %v175 = vld [vmem:[%s170 + $0x10] sm:$0xf]
    %v176 = vld [vmem:[%s170 + $0x14] sm:$0xf]
    %v177 = vld [vmem:[%s170 + $0x18] sm:$0xf]
    %v178 = vld [vmem:[%s170 + $0x1c] sm:$0xf]
    %v179 = vld [vmem:[%s170 + $0x20] sm:$0xf]
    %v180 = vld [vmem:[%s170 + $0x24] sm:$0xf]
    %v181 = vld [vmem:[%s170 + $0x28] sm:$0xf]
    %v182 = vld [vmem:[%s170 + $0x2c] sm:$0xf]
    %v183 = vld [vmem:[%s170 + $0x30] sm:$0xf]
    %v184 = vld [vmem:[%s170 + $0x34] sm:$0xf]
    %v185 = vld [vmem:[%s170 + $0x38] sm:$0xf]
    %v186 = vld [vmem:[%s170 + $0x3c] sm:$0xf]
    %v203 = vunpack.c.l.b16 %v171
    %v204 = vunpack.c.l.b16 %v172
    %v205 = vunpack.c.l.b16 %v173
    %v206 = vunpack.c.l.b16 %v174
    %v207 = vunpack.c.l.b16 %v175
    %v208 = vunpack.c.l.b16 %v176
    %v209 = vunpack.c.l.b16 %v177
    %v210 = vunpack.c.l.b16 %v178
    %v211 = vunpack.c.l.b16 %v179
    %v212 = vunpack.c.l.b16 %v180
    %v213 = vunpack.c.l.b16 %v181
    %v214 = vunpack.c.l.b16 %v182
    %v215 = vunpack.c.l.b16 %v183
    %v216 = vunpack.c.l.b16 %v184
    %v217 = vunpack.c.l.b16 %v185
    %v218 = vunpack.c.l.b16 %v186
    %v219 = vpack.c.b16 %v204, %v203
    %v220 = vpack.c.b16 %v206, %v205
    %v221 = vpack.c.b16 %v208, %v207
    %v222 = vpack.c.b16 %v210, %v209
    %v223 = vpack.c.b16 %v212, %v211
    %v224 = vpack.c.b16 %v214, %v213
    %v225 = vpack.c.b16 %v216, %v215
    %v226 = vpack.c.b16 %v218, %v217
    %235 = vmatprep.subr.bf16.mxu0 0
    %236 = vmatpush1.bf16.msra.mxu0 %v219
    %237 = vmatprep.subr.bf16.mxu0 0
    %238 = vmatpush1.bf16.msra.mxu0 %v220
    %239 = vmatprep.subr.bf16.mxu0 0
    %240 = vmatpush1.bf16.msra.mxu0 %v221
    %241 = vmatprep.subr.bf16.mxu0 0
    %242 = vmatpush1.bf16.msra.mxu0 %v222
    %243 = vmatprep.subr.bf16.mxu0 0
    %244 = vmatpush1.bf16.msra.mxu0 %v223
    %245 = vmatprep.subr.bf16.mxu0 0
    %246 = vmatpush1.bf16.msra.mxu0 %v224
    %247 = vmatprep.subr.bf16.mxu0 0
    %248 = vmatpush1.bf16.msra.mxu0 %v225
    %249 = vmatprep.subr.bf16.mxu0 0
    %250 = vmatpush1.bf16.msra.mxu0 %v226
    %251 = vmatprep.subr.bf16.mxu0 0
    %252 = vmatpush1.bf16.msra.mxu0 0
    %253 = vmatprep.subr.bf16.mxu0 0
    %254 = vmatpush1.bf16.msra.mxu0 0
    %255 = vmatprep.subr.bf16.mxu0 0
    %256 = vmatpush1.bf16.msra.mxu0 0
    %257 = vmatprep.subr.bf16.mxu0 0
    %258 = vmatpush1.bf16.msra.mxu0 0
    %259 = vmatprep.subr.bf16.mxu0 0
    %260 = vmatpush1.bf16.msra.mxu0 0
    %261 = vmatprep.subr.bf16.mxu0 0
    %262 = vmatpush1.bf16.msra.mxu0 0
    %263 = vmatprep.subr.bf16.mxu0 0
    %264 = vmatpush1.bf16.msra.mxu0 0
    %265 = vmatprep.subr.bf16.mxu0 0
    %266 = vmatpush1.bf16.msra.mxu0 0
    %267 = vmatprep.mubr.bf16.mxu0 0
    %268 = vmatmul.mubr.bf16.gmra.mrb[0].mxu0 %v169
    %v269 = vpop.f32.mrb[0].mxu0
    %v270 = vadd.f32 0.0, %v269
    %v271 = vpop.f32.mrb[0].mxu0
    %v272 = vpop.f32.mrb[0].mxu0
    %v273 = vpop.f32.mrb[0].mxu0
    %274 = vdwg.mxu0
    %v276 = vlaneseq
    %v277 = vshrl.u32 %v276, 7
    %v278 = vsub.s32 0, %v277
    %v279 = vrot.slane %v63, %v278
    %v280 = vlaneseq
    %v281 = vshrl.u32 %v280, 7
    %v282 = vsub.s32 1, %v281
    %v283 = vrot.slane %v63, %v282
    %v286 = vadd.f32 %v164, %v279
    %v287 = vadd.f32 %v270, %v283
    %v288 = vmax.f32 %v286, 0.0
    %v289 = vmax.f32 %v287, 0.0
    %v290 = vld [vmem:[%s4] sm:$0x3]
    %v291 = vpack.c.bf16 %v288, %v288
    %v292 = vld [vmem:[#allocation7] sm:$0xf]
    %v293 = vld [vmem:[#allocation7 + $0x4] sm:$0xf]
    %v294 = vld [vmem:[#allocation7 + $0x8] sm:$0xf]
    %v295 = vld [vmem:[#allocation7 + $0xc] sm:$0xf]
    %v296 = vld [vmem:[#allocation7 + $0x10] sm:$0xf]
    %v297 = vld [vmem:[#allocation7 + $0x14] sm:$0xf]
    %v298 = vld [vmem:[#allocation7 + $0x18] sm:$0xf]
    %v299 = vld [vmem:[#allocation7 + $0x1c] sm:$0xf]
    %v300 = vld [vmem:[#allocation7 + $0x20] sm:$0xf]
    %v301 = vld [vmem:[#allocation7 + $0x24] sm:$0xf]
    %v302 = vld [vmem:[#allocation7 + $0x28] sm:$0xf]
    %v303 = vld [vmem:[#allocation7 + $0x2c] sm:$0xf]
    %v304 = vld [vmem:[#allocation7 + $0x30] sm:$0xf]
    %v305 = vld [vmem:[#allocation7 + $0x34] sm:$0xf]
    %v306 = vld [vmem:[#allocation7 + $0x38] sm:$0xf]
    %v307 = vld [vmem:[#allocation7 + $0x3c] sm:$0xf]
    %v324 = vunpack.c.l.b16 %v292
    %v325 = vunpack.c.l.b16 %v293
    %v326 = vunpack.c.l.b16 %v294
    %v327 = vunpack.c.l.b16 %v295
    %v328 = vunpack.c.l.b16 %v296
    %v329 = vunpack.c.l.b16 %v297
    %v330 = vunpack.c.l.b16 %v298
    %v331 = vunpack.c.l.b16 %v299
    %v332 = vunpack.c.l.b16 %v300
    %v333 = vunpack.c.l.b16 %v301
    %v334 = vunpack.c.l.b16 %v302
    %v335 = vunpack.c.l.b16 %v303
    %v336 = vunpack.c.l.b16 %v304
    %v337 = vunpack.c.l.b16 %v305
    %v338 = vunpack.c.l.b16 %v306
    %v339 = vunpack.c.l.b16 %v307
    %v340 = vpack.c.b16 %v325, %v324
    %v341 = vpack.c.b16 %v327, %v326
    %v342 = vpack.c.b16 %v329, %v328
    %v343 = vpack.c.b16 %v331, %v330
    %v344 = vpack.c.b16 %v333, %v332
    %v345 = vpack.c.b16 %v335, %v334
    %v346 = vpack.c.b16 %v337, %v336
    %v347 = vpack.c.b16 %v339, %v338
    %356 = vmatprep.subr.bf16.mxu0 0
    %357 = vmatpush1.bf16.msra.mxu0 %v340
    %358 = vmatprep.subr.bf16.mxu0 0
    %359 = vmatpush1.bf16.msra.mxu0 %v341
    %360 = vmatprep.subr.bf16.mxu0 0
    %361 = vmatpush1.bf16.msra.mxu0 %v342
    %362 = vmatprep.subr.bf16.mxu0 0
    %363 = vmatpush1.bf16.msra.mxu0 %v343
    %364 = vmatprep.subr.bf16.mxu0 0
    %365 = vmatpush1.bf16.msra.mxu0 %v344
    %366 = vmatprep.subr.bf16.mxu0 0
    %367 = vmatpush1.bf16.msra.mxu0 %v345
    %368 = vmatprep.subr.bf16.mxu0 0
    %369 = vmatpush1.bf16.msra.mxu0 %v346
    %370 = vmatprep.subr.bf16.mxu0 0
    %371 = vmatpush1.bf16.msra.mxu0 %v347
    %372 = vmatprep.subr.bf16.mxu0 0
    %373 = vmatpush1.bf16.msra.mxu0 0
    %374 = vmatprep.subr.bf16.mxu0 0
    %375 = vmatpush1.bf16.msra.mxu0 0
    %376 = vmatprep.subr.bf16.mxu0 0
    %377 = vmatpush1.bf16.msra.mxu0 0
    %378 = vmatprep.subr.bf16.mxu0 0
    %379 = vmatpush1.bf16.msra.mxu0 0
    %380 = vmatprep.subr.bf16.mxu0 0
    %381 = vmatpush1.bf16.msra.mxu0 0
    %382 = vmatprep.subr.bf16.mxu0 0
    %383 = vmatpush1.bf16.msra.mxu0 0
    %384 = vmatprep.subr.bf16.mxu0 0
    %385 = vmatpush1.bf16.msra.mxu0 0
    %386 = vmatprep.subr.bf16.mxu0 0
    %387 = vmatpush1.bf16.msra.mxu0 0
    %388 = vmatprep.mubr.bf16.mxu0 0
    %389 = vmatmul.mubr.bf16.gmra.mrb[0].mxu0 %v291
    %v390 = vpop.f32.mrb[0].mxu0
    %v391 = vadd.f32 0.0, %v390
    %v392 = vpop.f32.mrb[0].mxu0
    %v393 = vpop.f32.mrb[0].mxu0
    %v394 = vpop.f32.mrb[0].mxu0
    %395 = vdwg.mxu0
    %v396 = vpack.c.bf16 %v289, %v289
    %s397 = scalar_lea.vmem [#allocation7], 64
    %v398 = vld [vmem:[%s397] sm:$0xf]
    %v399 = vld [vmem:[%s397 + $0x4] sm:$0xf]
    %v400 = vld [vmem:[%s397 + $0x8] sm:$0xf]
    %v401 = vld [vmem:[%s397 + $0xc] sm:$0xf]
    %v402 = vld [vmem:[%s397 + $0x10] sm:$0xf]
    %v403 = vld [vmem:[%s397 + $0x14] sm:$0xf]
    %v404 = vld [vmem:[%s397 + $0x18] sm:$0xf]
    %v405 = vld [vmem:[%s397 + $0x1c] sm:$0xf]
    %v406 = vld [vmem:[%s397 + $0x20] sm:$0xf]
    %v407 = vld [vmem:[%s397 + $0x24] sm:$0xf]
    %v408 = vld [vmem:[%s397 + $0x28] sm:$0xf]
    %v409 = vld [vmem:[%s397 + $0x2c] sm:$0xf]
    %v410 = vld [vmem:[%s397 + $0x30] sm:$0xf]
    %v411 = vld [vmem:[%s397 + $0x34] sm:$0xf]
    %v412 = vld [vmem:[%s397 + $0x38] sm:$0xf]
    %v413 = vld [vmem:[%s397 + $0x3c] sm:$0xf]
    %v430 = vunpack.c.l.b16 %v398
    %v431 = vunpack.c.l.b16 %v399
    %v432 = vunpack.c.l.b16 %v400
    %v433 = vunpack.c.l.b16 %v401
    %v434 = vunpack.c.l.b16 %v402
    %v435 = vunpack.c.l.b16 %v403
    %v436 = vunpack.c.l.b16 %v404
    %v437 = vunpack.c.l.b16 %v405
    %v438 = vunpack.c.l.b16 %v406
    %v439 = vunpack.c.l.b16 %v407
    %v440 = vunpack.c.l.b16 %v408
    %v441 = vunpack.c.l.b16 %v409
    %v442 = vunpack.c.l.b16 %v410
    %v443 = vunpack.c.l.b16 %v411
    %v444 = vunpack.c.l.b16 %v412
    %v445 = vunpack.c.l.b16 %v413
    %v446 = vpack.c.b16 %v431, %v430
    %v447 = vpack.c.b16 %v433, %v432
    %v448 = vpack.c.b16 %v435, %v434
    %v449 = vpack.c.b16 %v437, %v436
    %v450 = vpack.c.b16 %v439, %v438
    %v451 = vpack.c.b16 %v441, %v440
    %v452 = vpack.c.b16 %v443, %v442
    %v453 = vpack.c.b16 %v445, %v444
    %462 = vmatprep.subr.bf16.mxu0 0
    %463 = vmatpush1.bf16.msra.mxu0 %v446
    %464 = vmatprep.subr.bf16.mxu0 0
    %465 = vmatpush1.bf16.msra.mxu0 %v447
    %466 = vmatprep.subr.bf16.mxu0 0
    %467 = vmatpush1.bf16.msra.mxu0 %v448
    %468 = vmatprep.subr.bf16.mxu0 0
    %469 = vmatpush1.bf16.msra.mxu0 %v449
    %470 = vmatprep.subr.bf16.mxu0 0
    %471 = vmatpush1.bf16.msra.mxu0 %v450
    %472 = vmatprep.subr.bf16.mxu0 0
    %473 = vmatpush1.bf16.msra.mxu0 %v451
    %474 = vmatprep.subr.bf16.mxu0 0
    %475 = vmatpush1.bf16.msra.mxu0 %v452
    %476 = vmatprep.subr.bf16.mxu0 0
    %477 = vmatpush1.bf16.msra.mxu0 %v453
    %478 = vmatprep.subr.bf16.mxu0 0
    %479 = vmatpush1.bf16.msra.mxu0 0
    %480 = vmatprep.subr.bf16.mxu0 0
    %481 = vmatpush1.bf16.msra.mxu0 0
    %482 = vmatprep.subr.bf16.mxu0 0
    %483 = vmatpush1.bf16.msra.mxu0 0
    %484 = vmatprep.subr.bf16.mxu0 0
    %485 = vmatpush1.bf16.msra.mxu0 0
    %486 = vmatprep.subr.bf16.mxu0 0
    %487 = vmatpush1.bf16.msra.mxu0 0
    %488 = vmatprep.subr.bf16.mxu0 0
    %489 = vmatpush1.bf16.msra.mxu0 0
    %490 = vmatprep.subr.bf16.mxu0 0
    %491 = vmatpush1.bf16.msra.mxu0 0
    %492 = vmatprep.subr.bf16.mxu0 0
    %493 = vmatpush1.bf16.msra.mxu0 0
    %494 = vmatprep.mubr.bf16.mxu0 0
    %495 = vmatmul.mubr.bf16.gmra.mrb[0].mxu0 %v396
    %v496 = vpop.f32.mrb[0].mxu0
    %v497 = vadd.f32 0.0, %v496
    %v498 = vpop.f32.mrb[0].mxu0
    %v499 = vpop.f32.mrb[0].mxu0
    %v500 = vpop.f32.mrb[0].mxu0
    %501 = vdwg.mxu0
    %v503 = vlaneseq
    %v504 = vshrl.u32 %v503, 7
    %v505 = vsub.s32 0, %v504
    %v506 = vrot.slane %v290, %v505
    %v507 = vlaneseq
    %v508 = vshrl.u32 %v507, 7
    %v509 = vsub.s32 1, %v508
    %v510 = vrot.slane %v290, %v509
    %v513 = vadd.f32 %v391, %v506
    %v514 = vadd.f32 %v497, %v510
    %v515 = vmax.f32 %v513, 0.0
    %v516 = vmax.f32 %v514, 0.0
    %517 = vst [vmem:[#allocation8] sm:$0xff] %v515
    %518 = vst [vmem:[#allocation8 + $0x8] sm:$0xff] %v516
    // Predicated region
    $region34: #{tpu_custom_call.1} parent=1 // pred_check
      _
    $region35: #{tpu_custom_call.1} parent=1 // pred_check_branch
      %520 = sbr.rel (0) target = $region37
    $region36: #{tpu_custom_call.1} parent=1 // pred_region
      %s522 = ssub.s32 256, 256
      %523 = vsyncadd [#allocation4], %s522
      %s525 = sshll.u32 [#allocation8], 4
      %s526 = int_to_ptr.vmem [resolvable:$true] %s525
      %528 = dma.vmem_to_hbm [thread:$0]  %s526, 256, %s5, [#allocation4]
    $region37: #{tpu_custom_call.1} parent=1 // pred_fallthru
      _
    // Predicated region
    $region38: #{tpu_custom_call.1} parent=1 // pred_check
      _
    $region39: #{tpu_custom_call.1} parent=1 // pred_check_branch
      %530 = sbr.rel (0) target = $region41
    $region40: #{tpu_custom_call.1} parent=1 // pred_region
      %531 = dma.done [#allocation4], 256
    $region41: #{tpu_custom_call.1} parent=1 // pred_fallthru
      _
    %532 = vsyncpa [#allocation3], 1
    %533 = vsyncpa [#allocation6], 1
    %534 = vsyncpa [#allocation4], 1

</llo_original>
